<compile_context>
chip_gen: v6e
topology: v6e:2x2x1
jax: 0.10.0
libtpu: 0.0.40
codegen_flags: <defaults>
</compile_context>

<pallas_src>
import math
import functools

import numpy as np
import jax
import jax.numpy as jnp
from jax import lax
from jax.experimental import pallas as pl
from jax.experimental.pallas import tpu as pltpu


# ----------------------------- fused kernel ------------------------------

def _transform_kernel(x_ref, w_ref, b_ref, g_ref, beta_ref, o_ref, *,
                      eps, act, inv_d):
    # x: (tm, Din) input dtype, w: (Din, Dout) bf16, b/g/beta: (1, Dout) f32.
    # bf16 operands feed the MXU; accumulation is f32.
    h = jnp.dot(x_ref[...].astype(w_ref.dtype), w_ref[...],
                preferred_element_type=jnp.float32)
    h = h + b_ref[...].astype(jnp.float32)

    # activation (static choice, matching ACT2FN in the PyTorch module)
    if act == "gelu":
        # exact erf-based gelu: x * 0.5 * (1 + erf(x / sqrt(2)))
        h = h * 0.5 * (1.0 + lax.erf(h * jnp.float32(1.0 / math.sqrt(2.0))))
    elif act == "relu":
        h = jnp.maximum(h, 0.0)
    elif act == "swish":
        h = h * jax.nn.sigmoid(h)
    else:
        raise ValueError(f"unsupported activation: {act}")

    # LayerNorm over the last axis, one-pass stats: var = E[h^2] - mean^2
    s1 = jnp.sum(h, axis=-1, keepdims=True)
    s2 = jnp.sum(h * h, axis=-1, keepdims=True)
    mean = s1 * jnp.float32(inv_d)
    var = s2 * jnp.float32(inv_d) - mean * mean
    xn = (h - mean) * lax.rsqrt(var + jnp.float32(eps))
    o_ref[...] = (xn * g_ref[...].astype(jnp.float32)
                  + beta_ref[...].astype(jnp.float32)).astype(o_ref.dtype)


# ----------------------------- tiling / budgeting ------------------------------

def _vmem_capacity_bytes():
    try:
        return int(pltpu.get_tpu_info().vmem_capacity_bytes)
    except Exception:
        return 64 * 1024 * 1024  # conservative fallback: v7x per-TC VMEM


def _pick_row_tile(m_rows, d, in_bytes, out_bytes, w_bytes, vmem_budget):
    """Largest row tile whose working set fits the VMEM budget."""
    # resident (single-buffered) operands: weight + bias/gamma/beta
    resident = d * d * w_bytes + 3 * d * 4
    # per-row cost: double-buffered x tile + double-buffered out tile + f32 h temp
    per_row = d * (2 * in_bytes + 2 * out_bytes + 4)
    budget_rows = max(8, (vmem_budget - resident) // per_row)

    tm = int(min(budget_rows, 1024, max(m_rows, 8)))
    if tm >= 256:
        tm = (tm // 256) * 256       # fill 256-wide MXU (v6e/v7x); fine on v5e
    elif tm >= 128:
        tm = (tm // 128) * 128
    else:
        tm = max(8, (tm // 8) * 8)

    # keep at least 2 grid steps when M allows: enables pipelining and keeps
    # both v7x TensorCores busy under dimension_semantics=("parallel",)
    while tm > 8 and pl.cdiv(m_rows, tm) < 2:
        tm = max(8, ((tm // 2) // 8) * 8)
    return tm


# ----------------------------- wrapper ------------------------------

def bert_prediction_head_transform(x, params, *, eps=1e-12, act="gelu"):
    """x: (..., D).  params['w']: (D, D) stored (Din, Dout) bf16; b/gamma/beta: (D,) f32."""
    w, b, gamma, beta = params["w"], params["b"], params["gamma"], params["beta"]
    orig_shape = x.shape
    D = orig_shape[-1]
    M = int(np.prod(orig_shape[:-1]))
    x2 = x.reshape(M, D)

    in_bytes = x.dtype.itemsize
    out_bytes = x.dtype.itemsize
    w_bytes = w.dtype.itemsize

    capacity = _vmem_capacity_bytes()
    vmem_budget = int(capacity * 0.7)              # leave compiler headroom
    tm = _pick_row_tile(M, D, in_bytes, out_bytes, w_bytes, vmem_budget)

    # Pad rows so the grid divides evenly (keeps blocks dense, no 1-step grid).
    n_steps = int(pl.cdiv(M, tm))
    M_pad = n_steps * tm
    if M_pad != M:
        x2 = jnp.pad(x2, ((0, M_pad - M), (0, 0)))

    # Explicit VMEM limit from the actual footprint, capped below the physical
    # ceiling of the current generation.
    used = (2 * tm * D * in_bytes + 2 * tm * D * out_bytes + tm * D * 4
            + D * D * w_bytes + 3 * D * 4)
    vmem_limit = int(min(capacity - (8 << 20), max(2 * used, 16 << 20)))
    vmem_limit = int(max(vmem_limit, used + (4 << 20)))

    cost = pl.CostEstimate(
        flops=2 * M_pad * D * D + 10 * M_pad * D,
        transcendentals=M_pad * D,
        bytes_accessed=M_pad * D * (in_bytes + out_bytes) + D * D * w_bytes + 3 * D * 4,
    )

    # TODO(synk): for bf16 D >~ 4096 (f32 D >~ 2048) on v7x, add a K-reduction
    # grid axis with a streamed weight tile + f32 accumulator instead of a
    # fully-resident (D, D) weight.

    const = pl.Buffered(1)   # grid-invariant operands: no double-buffering
    kern = functools.partial(_transform_kernel, eps=eps, act=act,
                             inv_d=float(1.0 / D))
    out = pl.pallas_call(
        kern,
        out_shape=jax.ShapeDtypeStruct((M_pad, D), x.dtype),
        grid=(n_steps,),
        in_specs=[
            pl.BlockSpec((tm, D), lambda i: (i, 0)),                        # activation rows
            pl.BlockSpec((D, D), lambda i: (0, 0), pipeline_mode=const),    # weight, resident
            pl.BlockSpec((1, D), lambda i: (0, 0), pipeline_mode=const),    # bias
            pl.BlockSpec((1, D), lambda i: (0, 0), pipeline_mode=const),    # LN gamma
            pl.BlockSpec((1, D), lambda i: (0, 0), pipeline_mode=const),    # LN beta
        ],
        out_specs=pl.BlockSpec((tm, D), lambda i: (i, 0)),
        compiler_params=pltpu.CompilerParams(
            dimension_semantics=("parallel",),   # shard row tiles (v7x 2 TCs)
            vmem_limit_bytes=vmem_limit,
        ),
        cost_estimate=cost,
    )(x2, w, b.reshape(1, D), gamma.reshape(1, D), beta.reshape(1, D))

    if M_pad != M:
        out = out[:M]
    return out.reshape(orig_shape)


# ----------------------------- params init ------------------------------

def init_params(key, hidden):
    k_w, = jax.random.split(key, 1)
    # Weight created directly in (Din, Dout) layout and stored bf16 (native MXU
    # operand dtype); y = x @ w + b matches F.linear(x, w_torch, b) with
    # w_torch = w.T.
    w = (jax.random.normal(k_w, (hidden, hidden), jnp.float32) * 0.02
         ).astype(jnp.bfloat16)
    return {
        "w": w,
        "b": jnp.zeros((hidden,), jnp.float32),
        "gamma": jnp.ones((hidden,), jnp.float32),
        "beta": jnp.zeros((hidden,), jnp.float32),
    }


# ----------------------------- references (pure JAX) ------------------------------

def _reference_bf16(x, params, eps=1e-12):
    # Same numerics as the kernel: bf16 matmul operands, f32 accumulation.
    D = x.shape[-1]
    h = jnp.dot(x.astype(jnp.bfloat16).reshape(-1, D),
                params["w"].astype(jnp.bfloat16),
                preferred_element_type=jnp.float32).reshape(x.shape)
    h = h + params["b"]
    h = h * 0.5 * (1.0 + lax.erf(h / jnp.float32(math.sqrt(2.0))))
    mean = jnp.mean(h, axis=-1, keepdims=True)
    var = jnp.mean((h - mean) ** 2, axis=-1, keepdims=True)
    return (h - mean) / jnp.sqrt(var + eps) * params["gamma"] + params["beta"]


def _reference_f32(x, params, eps=1e-12):
    # Full-precision semantic reference of the PyTorch module.
    h = jnp.einsum("...d,de->...e", x,
                   params["w"].astype(jnp.float32)) + params["b"]
    h = h * 0.5 * (1.0 + lax.erf(h / jnp.float32(math.sqrt(2.0))))
    mean = jnp.mean(h, axis=-1, keepdims=True)
    var = jnp.mean((h - mean) ** 2, axis=-1, keepdims=True)
    return (h - mean) / jnp.sqrt(var + eps) * params["gamma"] + params["beta"]


# ----------------------------- main ------------------------------

if __name__ == "__main__":
    # Small but lane-dense shapes: hidden = 128 (full vreg lane width),
    # B*L = 512 rows -> VMEM-aware tile picks 256 rows, 2 parallel grid steps.
    B, L, HIDDEN = 2, 256, 128

    key = jax.random.PRNGKey(0)
    k_p, k_x = jax.random.split(key, 2)

    params = init_params(k_p, HIDDEN)
    hidden_states = jax.random.normal(k_x, (B, L, HIDDEN), jnp.float32)

    out = bert_prediction_head_transform(hidden_states, params,
                                         eps=1e-12, act="gelu")
    out = jax.block_until_ready(out)

    assert out.shape == (B, L, HIDDEN)
    assert bool(jnp.all(jnp.isfinite(out)))

    # Tight check vs a reference using the same bf16 matmul numerics.
    ref = _reference_bf16(hidden_states, params)
    assert bool(jnp.allclose(out, ref, atol=1e-4, rtol=1e-4)), (
        float(jnp.max(jnp.abs(out - ref))))

    # Loose semantic check vs the full f32 PyTorch-equivalent reference
    # (difference is just bf16 weight/operand rounding).
    ref32 = _reference_f32(hidden_states, params)
    assert bool(jnp.allclose(out, ref32, atol=1e-1)), (
        float(jnp.max(jnp.abs(out - ref32))))

    print("KERNEL_OK")
</pallas_src>

<mosaic_0001>
module attributes {stable_mosaic.version = 11 : i64} {
  func.func @_transform_kernel(%arg0: i32, %arg1: memref<256x128xf32, #tpu.memory_space<vmem>>, %arg2: memref<128x128xbf16, #tpu.memory_space<vmem>>, %arg3: memref<1x128xf32, #tpu.memory_space<vmem>>, %arg4: memref<1x128xf32, #tpu.memory_space<vmem>>, %arg5: memref<1x128xf32, #tpu.memory_space<vmem>>, %arg6: memref<256x128xf32, #tpu.memory_space<vmem>>) attributes {dimension_semantics = [#tpu.dimension_semantics<parallel>], iteration_bounds = array<i64: 2>, scalar_prefetch = 0 : i64, scratch_operands = 0 : i64, tpu.core_type = #tpu.core_type<tc>, window_params = [{transform_indices = @transform_0, window_bounds = array<i64: 256, 128>}, {pipeline_mode = #tpu.pipeline_mode<synchronous>, transform_indices = @transform_1, window_bounds = array<i64: 128, 128>}, {pipeline_mode = #tpu.pipeline_mode<synchronous>, transform_indices = @transform_2, window_bounds = array<i64: 1, 128>}, {pipeline_mode = #tpu.pipeline_mode<synchronous>, transform_indices = @transform_3, window_bounds = array<i64: 1, 128>}, {pipeline_mode = #tpu.pipeline_mode<synchronous>, transform_indices = @transform_4, window_bounds = array<i64: 1, 128>}, {transform_indices = @transform_5, window_bounds = array<i64: 256, 128>}]} {
    %c0 = arith.constant 0 : index
    %c0_0 = arith.constant 0 : index
    %0 = vector.load %arg1[%c0, %c0_0] : memref<256x128xf32, #tpu.memory_space<vmem>>, vector<256x128xf32>
    %1 = arith.truncf %0 : vector<256x128xf32> to vector<256x128xbf16>
    %c0_1 = arith.constant 0 : index
    %c0_2 = arith.constant 0 : index
    %2 = vector.load %arg2[%c0_1, %c0_2] : memref<128x128xbf16, #tpu.memory_space<vmem>>, vector<128x128xbf16>
    %cst = arith.constant dense<0.000000e+00> : vector<256x128xf32>
    %3 = tpu.matmul %1, %2, %cst {dimension_numbers = #tpu.dot_dimension_numbers<[1], [0], [0], [1], [0, 0, 1, 1], [], []>} : vector<256x128xbf16>, vector<128x128xbf16>, vector<256x128xf32> -> vector<256x128xf32>
    %c0_3 = arith.constant 0 : index
    %c0_4 = arith.constant 0 : index
    %4 = vector.load %arg3[%c0_3, %c0_4] : memref<1x128xf32, #tpu.memory_space<vmem>>, vector<1x128xf32>
    %5 = vector.broadcast %4 : vector<1x128xf32> to vector<256x128xf32>
    %6 = arith.addf %3, %5 : vector<256x128xf32>
    %cst_5 = arith.constant 5.000000e-01 : f32
    %7 = vector.broadcast %cst_5 : f32 to vector<256x128xf32>
    %8 = arith.mulf %6, %7 : vector<256x128xf32>
    %cst_6 = arith.constant 0.707106769 : f32
    %9 = vector.broadcast %cst_6 : f32 to vector<256x128xf32>
    %10 = arith.mulf %6, %9 : vector<256x128xf32>
    %11 = math.erf %10 : vector<256x128xf32>
    %cst_7 = arith.constant 1.000000e+00 : f32
    %12 = vector.broadcast %cst_7 : f32 to vector<256x128xf32>
    %13 = arith.addf %12, %11 : vector<256x128xf32>
    %14 = arith.mulf %8, %13 : vector<256x128xf32>
    %cst_8 = arith.constant dense<0.000000e+00> : vector<256xf32>
    %15 = vector.multi_reduction <add>, %14, %cst_8 [1] : vector<256x128xf32> to vector<256xf32>
    %16 = vector.shape_cast %15 : vector<256xf32> to vector<256x1xf32>
    %17 = arith.mulf %14, %14 : vector<256x128xf32>
    %cst_9 = arith.constant dense<0.000000e+00> : vector<256xf32>
    %18 = vector.multi_reduction <add>, %17, %cst_9 [1] : vector<256x128xf32> to vector<256xf32>
    %19 = vector.shape_cast %18 : vector<256xf32> to vector<256x1xf32>
    %cst_10 = arith.constant 7.812500e-03 : f32
    %20 = vector.broadcast %cst_10 : f32 to vector<256x1xf32>
    %21 = arith.mulf %16, %20 : vector<256x1xf32>
    %cst_11 = arith.constant 7.812500e-03 : f32
    %22 = vector.broadcast %cst_11 : f32 to vector<256x1xf32>
    %23 = arith.mulf %19, %22 : vector<256x1xf32>
    %24 = arith.mulf %21, %21 : vector<256x1xf32>
    %25 = arith.subf %23, %24 : vector<256x1xf32>
    %26 = vector.broadcast %21 : vector<256x1xf32> to vector<256x128xf32>
    %27 = arith.subf %14, %26 : vector<256x128xf32>
    %cst_12 = arith.constant 9.99999996E-13 : f32
    %28 = vector.broadcast %cst_12 : f32 to vector<256x1xf32>
    %29 = arith.addf %25, %28 : vector<256x1xf32>
    %30 = math.rsqrt %29 : vector<256x1xf32>
    %31 = vector.broadcast %30 : vector<256x1xf32> to vector<256x128xf32>
    %32 = arith.mulf %27, %31 : vector<256x128xf32>
    %c0_13 = arith.constant 0 : index
    %c0_14 = arith.constant 0 : index
    %33 = vector.load %arg4[%c0_13, %c0_14] : memref<1x128xf32, #tpu.memory_space<vmem>>, vector<1x128xf32>
    %34 = vector.broadcast %33 : vector<1x128xf32> to vector<256x128xf32>
    %35 = arith.mulf %32, %34 : vector<256x128xf32>
    %c0_15 = arith.constant 0 : index
    %c0_16 = arith.constant 0 : index
    %36 = vector.load %arg5[%c0_15, %c0_16] : memref<1x128xf32, #tpu.memory_space<vmem>>, vector<1x128xf32>
    %37 = vector.broadcast %36 : vector<1x128xf32> to vector<256x128xf32>
    %38 = arith.addf %35, %37 : vector<256x128xf32>
    %c0_17 = arith.constant 0 : index
    %c0_18 = arith.constant 0 : index
    %39 = vector.load %arg6[%c0_17, %c0_18] : memref<256x128xf32, #tpu.memory_space<vmem>>, vector<256x128xf32>
    tpu.vector_store %arg6[%c0_17, %c0_18], %38 {strides = array<i32>} : memref<256x128xf32, #tpu.memory_space<vmem>>, vector<256x128xf32>,
    return
  }
  func.func @transform_0(%arg0: i32) -> (i32, i32) {
    %c0_i32 = arith.constant 0 : i32
    %c0_i32_0 = arith.constant 0 : i32
    return %arg0, %c0_i32 : i32, i32
  }
  func.func @transform_1(%arg0: i32) -> (i32, i32) {
    %c0_i32 = arith.constant 0 : i32
    %c0_i32_0 = arith.constant 0 : i32
    %c0_i32_1 = arith.constant 0 : i32
    return %c0_i32, %c0_i32_0 : i32, i32
  }
  func.func @transform_2(%arg0: i32) -> (i32, i32) {
    %c0_i32 = arith.constant 0 : i32
    %c0_i32_0 = arith.constant 0 : i32
    %c0_i32_1 = arith.constant 0 : i32
    return %c0_i32, %c0_i32_0 : i32, i32
  }
  func.func @transform_3(%arg0: i32) -> (i32, i32) {
    %c0_i32 = arith.constant 0 : i32
    %c0_i32_0 = arith.constant 0 : i32
    %c0_i32_1 = arith.constant 0 : i32
    return %c0_i32, %c0_i32_0 : i32, i32
  }
  func.func @transform_4(%arg0: i32) -> (i32, i32) {
    %c0_i32 = arith.constant 0 : i32
    %c0_i32_0 = arith.constant 0 : i32
    %c0_i32_1 = arith.constant 0 : i32
    return %c0_i32, %c0_i32_0 : i32, i32
  }
  func.func @transform_5(%arg0: i32) -> (i32, i32) {
    %c0_i32 = arith.constant 0 : i32
    %c0_i32_0 = arith.constant 0 : i32
    return %arg0, %c0_i32 : i32, i32
  }
}

</mosaic_0001>

<llo_original>
// kernel: tpu_custom_call.1
$region0: #{tpu_custom_call.1}
  #allocation0 [shape = 'u32[]', space=smem, size = 0x4, offset = 0x4, fixed_abs, tag = 'smem constant byte address 0x4 - core index']
  #allocation1 [shape = 'u32[144,128]{1,0:T(1,128)}', space=vmem, size = 0x12000, scoped, tag = 'internal scratch']
  %s0 = inlined_call_operand.hbm [shape: f32[512,128], index: 0, kind: input, shape index: {}]
  %s1 = inlined_call_operand.hbm [shape: bf16[128,128], index: 1, kind: input, shape index: {}]
  %s2 = inlined_call_operand.vmem [shape: f32[1,128], index: 2, kind: input, shape index: {}]
  %s3 = inlined_call_operand.vmem [shape: f32[1,128], index: 3, kind: input, shape index: {}]
  %s4 = inlined_call_operand.vmem [shape: f32[1,128], index: 4, kind: input, shape index: {}]
  %s5 = inlined_call_operand.hbm [shape: f32[512,128], index: 5, kind: output, shape index: {}]
  %s6 = sld [smem:[#allocation0]]
  $region61: #{tpu_custom_call.1} parent=0
    _
  %s8 = ssub.s32 1, %s6
  %s9 = scalar_select 0, %s8, %s6
  $region1: #{tpu_custom_call.1} parent=0
    #allocation2 [shape = 'u8[262144]{0}', space=vmem, size = 0x40000, scoped, tag = 'input window, operand 0']
    #allocation3 [shape = 's32[2]{0}', space=sflag, size = 0x8, scoped, tag = 'scoped memory for tpu_custom_call.1']
    #allocation4 [shape = 's32[2]{0}', space=sflag, size = 0x8, scoped, tag = 'scoped memory for tpu_custom_call.1']
    #allocation5 [shape = 'u8[32768]{0}', space=vmem, size = 0x8000, scoped, tag = 'input window, operand 1, single buffered']
    #allocation6 [shape = 's32[1]{0}', space=sflag, size = 0x4, scoped, tag = 'scoped memory for tpu_custom_call.1']
    #allocation7 [shape = 'u8[262144]{0}', space=vmem, size = 0x40000, scoped, tag = 'output window, operand 0']
    %10 = vsyncpa [#allocation3], 0
    %s11 = scalar_lea.sflag [#allocation3], 1
    %12 = vsyncpa %s11, 0
    %13 = vsyncpa [#allocation6], 0
    %14 = vsyncpa [#allocation4], 0
    %s15 = scalar_lea.sflag [#allocation4], 1
    %16 = vsyncpa %s15, 0
    loop: start=0, step=1, limit=4
    $region2: #{tpu_custom_call.1} parent=1 // loop_pre_header
      _
    $region3: #{tpu_custom_call.1} parent=1 // loop_header
      %s18 = sphi 0, %s22
      %p19 = scmp.ge.s32.totalorder %s18, 4
      %s28 = sphi 0, %s30
      %s31 = sphi 0, %s28
      %s32 = sphi 0, %s31
      %s48 = sphi 0, %s32
      %s52 = sphi 0, %s52
      %s54 = sphi 0, %s52
      %s55 = sphi 0, %s54
      %s69 = sphi 0, %s55
      %s73 = sphi 0, %s73
      %s75 = sphi 0, %s73
      %s76 = sphi 0, %s75
      %s90 = sphi 0, %s76
      %s94 = sphi 0, %s94
      %s96 = sphi 0, %s94
      %s97 = sphi 0, %s96
      %s111 = sphi 0, %s97
      %s115 = sphi 0, %s115
      %s117 = sphi 0, %s115
      %s118 = sphi 0, %s117
      %s132 = sphi 0, %s118
      %s138 = sphi 0, %s140
      %s141 = sphi 0, %s138
      %s142 = sphi 0, %s141
      %s158 = sphi 0, %s142
    $region4: #{tpu_custom_call.1} parent=1 // loop_header_branch
      %21 = sbr.rel (%p19) target = $region8
    $region5: #{tpu_custom_call.1} parent=1 // loop_body
      %s23 = ssub.s32 %s18, 1
      %s24 = ssub.s32 %s18, 2
      %s25 = sadd.s32 %s18, 1
      %s26 = ssub.s32 %s18, %s25
      %p27 = scmp.eq.s32.totalorder %s26, 0
      %s29 = sadd.s32 %s28, 1
      %s30 = scalar_select %p27, %s28, %s29
      %p33 = pneg %p27
      %p34 = scmp.eq.s32.totalorder %s18, 1
      %p35 = por %p33, %p34
      %p36 = scmp.ne.s32.totalorder %s28, %s31
      %p37 = scmp.eq.s32.totalorder %s18, 0
      %p38 = por %p36, %p37
      %p39 = scmp.ne.s32.totalorder %s28, %s31
      %p40 = scmp.eq.s32.totalorder %s23, 1
      %p41 = por %p39, %p40
      %p42 = scmp.ne.s32.totalorder %s31, %s32
      %p43 = scmp.eq.s32.totalorder %s23, 0
      %p44 = por %p42, %p43
      %p45 = scmp.ne.s32.totalorder %s31, %s32
      %p46 = scmp.eq.s32.totalorder %s24, 1
      %p47 = por %p45, %p46
      %p49 = scmp.ne.s32.totalorder %s32, %s48
      %p50 = scmp.eq.s32.totalorder %s24, 0
      %p51 = por %p49, %p50
      %s53 = sadd.s32 %s52, 1
      %p56 = scmp.eq.s32.totalorder %s18, 1
      %p57 = scmp.ne.s32.totalorder %s52, %s54
      %p58 = scmp.eq.s32.totalorder %s18, 0
      %p59 = por %p57, %p58
      %p60 = scmp.ne.s32.totalorder %s52, %s54
      %p61 = scmp.eq.s32.totalorder %s23, 1
      %p62 = por %p60, %p61
      %p63 = scmp.ne.s32.totalorder %s54, %s55
      %p64 = scmp.eq.s32.totalorder %s23, 0
      %p65 = por %p63, %p64
      %p66 = scmp.ne.s32.totalorder %s54, %s55
      %p67 = scmp.eq.s32.totalorder %s24, 1
      %p68 = por %p66, %p67
      %p70 = scmp.ne.s32.totalorder %s55, %s69
      %p71 = scmp.eq.s32.totalorder %s24, 0
      %p72 = por %p70, %p71
      %s74 = sadd.s32 %s73, 1
      %p77 = scmp.eq.s32.totalorder %s18, 1
      %p78 = scmp.ne.s32.totalorder %s73, %s75
      %p79 = scmp.eq.s32.totalorder %s18, 0
      %p80 = por %p78, %p79
      %p81 = scmp.ne.s32.totalorder %s73, %s75
      %p82 = scmp.eq.s32.totalorder %s23, 1
      %p83 = por %p81, %p82
      %p84 = scmp.ne.s32.totalorder %s75, %s76
      %p85 = scmp.eq.s32.totalorder %s23, 0
      %p86 = por %p84, %p85
      %p87 = scmp.ne.s32.totalorder %s75, %s76
      %p88 = scmp.eq.s32.totalorder %s24, 1
      %p89 = por %p87, %p88
      %p91 = scmp.ne.s32.totalorder %s76, %s90
      %p92 = scmp.eq.s32.totalorder %s24, 0
      %p93 = por %p91, %p92
      %s95 = sadd.s32 %s94, 1
      %p98 = scmp.eq.s32.totalorder %s18, 1
      %p99 = scmp.ne.s32.totalorder %s94, %s96
      %p100 = scmp.eq.s32.totalorder %s18, 0
      %p101 = por %p99, %p100
      %p102 = scmp.ne.s32.totalorder %s94, %s96
      %p103 = scmp.eq.s32.totalorder %s23, 1
      %p104 = por %p102, %p103
      %p105 = scmp.ne.s32.totalorder %s96, %s97
      %p106 = scmp.eq.s32.totalorder %s23, 0
      %p107 = por %p105, %p106
      %p108 = scmp.ne.s32.totalorder %s96, %s97
      %p109 = scmp.eq.s32.totalorder %s24, 1
      %p110 = por %p108, %p109
      %p112 = scmp.ne.s32.totalorder %s97, %s111
      %p113 = scmp.eq.s32.totalorder %s24, 0
      %p114 = por %p112, %p113
      %s116 = sadd.s32 %s115, 1
      %p119 = scmp.eq.s32.totalorder %s18, 1
      %p120 = scmp.ne.s32.totalorder %s115, %s117
      %p121 = scmp.eq.s32.totalorder %s18, 0
      %p122 = por %p120, %p121
      %p123 = scmp.ne.s32.totalorder %s115, %s117
      %p124 = scmp.eq.s32.totalorder %s23, 1
      %p125 = por %p123, %p124
      %p126 = scmp.ne.s32.totalorder %s117, %s118
      %p127 = scmp.eq.s32.totalorder %s23, 0
      %p128 = por %p126, %p127
      %p129 = scmp.ne.s32.totalorder %s117, %s118
      %p130 = scmp.eq.s32.totalorder %s24, 1
      %p131 = por %p129, %p130
      %p133 = scmp.ne.s32.totalorder %s118, %s132
      %p134 = scmp.eq.s32.totalorder %s24, 0
      %p135 = por %p133, %p134
      %s136 = ssub.s32 %s18, %s25
      %p137 = scmp.eq.s32.totalorder %s136, 0
      %s139 = sadd.s32 %s138, 1
      %s140 = scalar_select %p137, %s138, %s139
      %p143 = pneg %p137
      %p144 = scmp.eq.s32.totalorder %s18, 1
      %p145 = por %p143, %p144
      %p146 = scmp.ne.s32.totalorder %s138, %s141
      %p147 = scmp.eq.s32.totalorder %s18, 0
      %p148 = por %p146, %p147
      %p149 = scmp.ne.s32.totalorder %s138, %s141
      %p150 = scmp.eq.s32.totalorder %s23, 1
      %p151 = por %p149, %p150
      %p152 = scmp.ne.s32.totalorder %s141, %s142
      %p153 = scmp.eq.s32.totalorder %s23, 0
      %p154 = por %p152, %p153
      %p155 = scmp.ne.s32.totalorder %s141, %s142
      %p156 = scmp.eq.s32.totalorder %s24, 1
      %p157 = por %p155, %p156
      %p159 = scmp.ne.s32.totalorder %s142, %s158
      %p160 = scmp.eq.s32.totalorder %s24, 0
      %p161 = por %p159, %p160
      %p162 = scmp.le.s32.totalorder 1, %s18
      %p163 = scmp.lt.s32.totalorder %s18, 3
      %p164 = pnand %p162, %p163
      %p165 = pneg %p164
      // Predicated region
      $region9: #{tpu_custom_call.1} parent=5 // pred_check
        _
      $region10: #{tpu_custom_call.1} parent=5 // pred_check_branch
        %167 = sbr.rel (%p164) target = $region12
      $region11: #{tpu_custom_call.1} parent=5 // pred_region
        %s168 = ssub.s32 %s18, 1
        // Predicated region
        $region13: #{tpu_custom_call.1} parent=11 // pred_check
          %p169 = pneg %p65
        $region14: #{tpu_custom_call.1} parent=11 // pred_check_branch
          %171 = sbr.rel (%p169) target = $region16
        $region15: #{tpu_custom_call.1} parent=11 // pred_region
          %s173 = ssub.s32 1024, 1024
          %174 = vsyncadd [#allocation6], %s173
          %s175 = sshll.u32 [#allocation5], 4
          %s176 = int_to_ptr.vmem [resolvable:$true] %s175
          %181 = dma.hbm_to_vmem [thread:$0]  %s1, 1024, %s176, [#allocation6], 64, 64, 4
        $region16: #{tpu_custom_call.1} parent=11 // pred_fallthru
          _
        // Predicated region
        $region17: #{tpu_custom_call.1} parent=11 // pred_check
          %p182 = pneg %p86
        $region18: #{tpu_custom_call.1} parent=11 // pred_check_branch
          %184 = sbr.rel (%p182) target = $region20
        $region19: #{tpu_custom_call.1} parent=11 // pred_region
          _
        $region20: #{tpu_custom_call.1} parent=11 // pred_fallthru
          _
        // Predicated region
        $region21: #{tpu_custom_call.1} parent=11 // pred_check
          %p185 = pneg %p107
        $region22: #{tpu_custom_call.1} parent=11 // pred_check_branch
          %187 = sbr.rel (%p185) target = $region24
        $region23: #{tpu_custom_call.1} parent=11 // pred_region
          _
        $region24: #{tpu_custom_call.1} parent=11 // pred_fallthru
          _
        // Predicated region
        $region25: #{tpu_custom_call.1} parent=11 // pred_check
          %p188 = pneg %p128
        $region26: #{tpu_custom_call.1} parent=11 // pred_check_branch
          %190 = sbr.rel (%p188) target = $region28
        $region27: #{tpu_custom_call.1} parent=11 // pred_region
          _
        $region28: #{tpu_custom_call.1} parent=11 // pred_fallthru
          _
      $region12: #{tpu_custom_call.1} parent=5 // pred_fallthru
        _
      %p191 = scmp.lt.s32.totalorder %s18, 2
      // Predicated region
      $region29: #{tpu_custom_call.1} parent=5 // pred_check
        %p192 = pneg %p191
      $region30: #{tpu_custom_call.1} parent=5 // pred_check_branch
        %194 = sbr.rel (%p192) target = $region32
      $region31: #{tpu_custom_call.1} parent=5 // pred_region
        // Predicated region
        $region33: #{tpu_custom_call.1} parent=31 // pred_check
          %p195 = pneg %p38
        $region34: #{tpu_custom_call.1} parent=31 // pred_check_branch
          %197 = sbr.rel (%p195) target = $region36
        $region35: #{tpu_custom_call.1} parent=31 // pred_region
          %s198 = sand.u32 %s28, 1
          %s199 = scalar_lea.sflag [#allocation3], %s198
          %s200 = sand.u32 %s28, 1
          %s201 = smul.addr %s200, 256
          %s202 = scalar_lea.vmem [#allocation2], %s201
          %s203 = smul.u32 32, %s18
          %s205 = ssub.s32 4096, 4096
          %206 = vsyncadd %s199, %s205
          %s207 = smul.addr %s203, 128
          %s208 = scalar_lea.hbm %s0, %s207
          %s209 = sshll.u32 %s202, 4
          %s210 = int_to_ptr.vmem [resolvable:$true] %s209
          %215 = dma.hbm_to_vmem [thread:$0]  %s208, 4096, %s210, %s199, 128, 128, 8
        $region36: #{tpu_custom_call.1} parent=31 // pred_fallthru
          _
      $region32: #{tpu_custom_call.1} parent=5 // pred_fallthru
        _
      %p216 = scmp.le.s32.totalorder 1, %s18
      %p217 = scmp.lt.s32.totalorder %s18, 3
      %p218 = pnand %p216, %p217
      %p219 = pneg %p218
      // Predicated region
      $region37: #{tpu_custom_call.1} parent=5 // pred_check
        _
      $region38: #{tpu_custom_call.1} parent=5 // pred_check_branch
        %221 = sbr.rel (%p218) target = $region40
      $region39: #{tpu_custom_call.1} parent=5 // pred_region
        %s222 = ssub.s32 %s18, 1
        %s223 = sand.u32 %s31, 1
        %s224 = scalar_lea.sflag [#allocation3], %s223
        %s225 = sand.u32 %s31, 1
        %s226 = smul.addr %s225, 256
        %s227 = scalar_lea.vmem [#allocation2], %s226
        // Predicated region
        $region41: #{tpu_custom_call.1} parent=39 // pred_check
          %p228 = pneg %p44
        $region42: #{tpu_custom_call.1} parent=39 // pred_check_branch
          %230 = sbr.rel (%p228) target = $region44
        $region43: #{tpu_custom_call.1} parent=39 // pred_region
          %231 = dma.done %s224, 4096
        $region44: #{tpu_custom_call.1} parent=39 // pred_fallthru
          _
        // Predicated region
        $region45: #{tpu_custom_call.1} parent=39 // pred_check
          %p232 = pneg %p65
        $region46: #{tpu_custom_call.1} parent=39 // pred_check_branch
          %234 = sbr.rel (%p232) target = $region48
        $region47: #{tpu_custom_call.1} parent=39 // pred_region
          %235 = dma.done [#allocation6], 1024
        $region48: #{tpu_custom_call.1} parent=39 // pred_fallthru
          _
        %s236 = sand.u32 %s31, 1
        %s237 = scalar_lea.sflag [#allocation3], %s236
        %s238 = sand.u32 %s31, 1
        %s239 = smul.addr %s238, 256
        %s240 = scalar_lea.vmem [#allocation2], %s239
        %p241 = pneg %p44
        %p242 = pneg %p41
        %p243 = pneg %p65
        %p244 = pneg %p62
        %p245 = pneg %p86
        %p246 = pneg %p83
        %p247 = pneg %p107
        %p248 = pneg %p104
        %p249 = pneg %p128
        %p250 = pneg %p125
        %p251 = pneg %p154
        %p252 = pneg %p151
        %s253 = sand.u32 %s141, 1
        %s254 = scalar_lea.sflag [#allocation4], %s253
        %s255 = sand.u32 %s141, 1
        %s256 = smul.addr %s255, 256
        %s257 = scalar_lea.vmem [#allocation7], %s256
        %s258 = smul.u32 32, %s23
        %s259 = smul.u32 32, %s23
        %v261 = vld [vmem:[%s227] sm:$0xff]
        %v262 = vld [vmem:[%s227 + $0x8] sm:$0xff]
        %v263 = vld [vmem:[%s227 + $0x10] sm:$0xff]
        %v264 = vld [vmem:[%s227 + $0x18] sm:$0xff]
        %v265 = vld [vmem:[%s227 + $0x20] sm:$0xff]
        %v266 = vld [vmem:[%s227 + $0x28] sm:$0xff]
        %v267 = vld [vmem:[%s227 + $0x30] sm:$0xff]
        %v268 = vld [vmem:[%s227 + $0x38] sm:$0xff]
        %v269 = vld [vmem:[%s227 + $0x40] sm:$0xff]
        %v270 = vld [vmem:[%s227 + $0x48] sm:$0xff]
        %v271 = vld [vmem:[%s227 + $0x50] sm:$0xff]
        %v272 = vld [vmem:[%s227 + $0x58] sm:$0xff]
        %v273 = vld [vmem:[%s227 + $0x60] sm:$0xff]
        %v274 = vld [vmem:[%s227 + $0x68] sm:$0xff]
        %v275 = vld [vmem:[%s227 + $0x70] sm:$0xff]
        %v276 = vld [vmem:[%s227 + $0x78] sm:$0xff]
        %v277 = vld [vmem:[%s227 + $0x80] sm:$0xff]
        %v278 = vld [vmem:[%s227 + $0x88] sm:$0xff]
        %v279 = vld [vmem:[%s227 + $0x90] sm:$0xff]
        %v280 = vld [vmem:[%s227 + $0x98] sm:$0xff]
        %v281 = vld [vmem:[%s227 + $0xa0] sm:$0xff]
        %v282 = vld [vmem:[%s227 + $0xa8] sm:$0xff]
        %v283 = vld [vmem:[%s227 + $0xb0] sm:$0xff]
        %v284 = vld [vmem:[%s227 + $0xb8] sm:$0xff]
        %v285 = vld [vmem:[%s227 + $0xc0] sm:$0xff]
        %v286 = vld [vmem:[%s227 + $0xc8] sm:$0xff]
        %v287 = vld [vmem:[%s227 + $0xd0] sm:$0xff]
        %v288 = vld [vmem:[%s227 + $0xd8] sm:$0xff]
        %v289 = vld [vmem:[%s227 + $0xe0] sm:$0xff]
        %v290 = vld [vmem:[%s227 + $0xe8] sm:$0xff]
        %v291 = vld [vmem:[%s227 + $0xf0] sm:$0xff]
        %v292 = vld [vmem:[%s227 + $0xf8] sm:$0xff]
        %v293 = vpack.c.bf16 %v262, %v261
        %v294 = vpack.c.bf16 %v264, %v263
        %v295 = vpack.c.bf16 %v266, %v265
        %v296 = vpack.c.bf16 %v268, %v267
        %v297 = vpack.c.bf16 %v270, %v269
        %v298 = vpack.c.bf16 %v272, %v271
        %v299 = vpack.c.bf16 %v274, %v273
        %v300 = vpack.c.bf16 %v276, %v275
        %v301 = vpack.c.bf16 %v278, %v277
        %v302 = vpack.c.bf16 %v280, %v279
        %v303 = vpack.c.bf16 %v282, %v281
        %v304 = vpack.c.bf16 %v284, %v283
        %v305 = vpack.c.bf16 %v286, %v285
        %v306 = vpack.c.bf16 %v288, %v287
        %v307 = vpack.c.bf16 %v290, %v289
        %v308 = vpack.c.bf16 %v292, %v291
        %v309 = vld [vmem:[#allocation5] sm:$0xf]
        %v310 = vld [vmem:[#allocation5 + $0x4] sm:$0xf]
        %v311 = vld [vmem:[#allocation5 + $0x8] sm:$0xf]
        %v312 = vld [vmem:[#allocation5 + $0xc] sm:$0xf]
        %v313 = vld [vmem:[#allocation5 + $0x10] sm:$0xf]
        %v314 = vld [vmem:[#allocation5 + $0x14] sm:$0xf]
        %v315 = vld [vmem:[#allocation5 + $0x18] sm:$0xf]
        %v316 = vld [vmem:[#allocation5 + $0x1c] sm:$0xf]
        %v317 = vld [vmem:[#allocation5 + $0x20] sm:$0xf]
        %v318 = vld [vmem:[#allocation5 + $0x24] sm:$0xf]
        %v319 = vld [vmem:[#allocation5 + $0x28] sm:$0xf]
        %v320 = vld [vmem:[#allocation5 + $0x2c] sm:$0xf]
        %v321 = vld [vmem:[#allocation5 + $0x30] sm:$0xf]
        %v322 = vld [vmem:[#allocation5 + $0x34] sm:$0xf]
        %v323 = vld [vmem:[#allocation5 + $0x38] sm:$0xf]
        %v324 = vld [vmem:[#allocation5 + $0x3c] sm:$0xf]
        %v325 = vld [vmem:[%s2] sm:$0x1]
        %v327 = vlaneseq
        %v328 = vshrl.u32 %v327, 7
        %v329 = vsub.s32 0, %v328
        %v330 = vrot.slane %v325, %v329
        %v348 = vunpack.c.l.b16 %v309
        %v349 = vunpack.c.l.b16 %v310
        %v350 = vunpack.c.l.b16 %v311
        %v351 = vunpack.c.l.b16 %v312
        %v352 = vunpack.c.l.b16 %v313
        %v353 = vunpack.c.l.b16 %v314
        %v354 = vunpack.c.l.b16 %v315
        %v355 = vunpack.c.l.b16 %v316
        %v356 = vunpack.c.l.b16 %v317
        %v357 = vunpack.c.l.b16 %v318
        %v358 = vunpack.c.l.b16 %v319
        %v359 = vunpack.c.l.b16 %v320
        %v360 = vunpack.c.l.b16 %v321
        %v361 = vunpack.c.l.b16 %v322
        %v362 = vunpack.c.l.b16 %v323
        %v363 = vunpack.c.l.b16 %v324
        %v364 = vpack.c.b16 %v349, %v348
        %v365 = vpack.c.b16 %v351, %v350
        %v366 = vpack.c.b16 %v353, %v352
        %v367 = vpack.c.b16 %v355, %v354
        %v368 = vpack.c.b16 %v357, %v356
        %v369 = vpack.c.b16 %v359, %v358
        %v370 = vpack.c.b16 %v361, %v360
        %v371 = vpack.c.b16 %v363, %v362
        %380 = vmatprep.subr.bf16.mxu0 0
        %381 = vmatpush1.bf16.msra.mxu0 %v371
        %382 = vmatprep.subr.bf16.mxu0 0
        %383 = vmatpush1.bf16.msra.mxu0 %v370
        %384 = vmatprep.subr.bf16.mxu0 0
        %385 = vmatpush1.bf16.msra.mxu0 %v369
        %386 = vmatprep.subr.bf16.mxu0 0
        %387 = vmatpush1.bf16.msra.mxu0 %v368
        %388 = vmatprep.subr.bf16.mxu0 0
        %389 = vmatpush1.bf16.msra.mxu0 %v367
        %390 = vmatprep.subr.bf16.mxu0 0
        %391 = vmatpush1.bf16.msra.mxu0 %v366
        %392 = vmatprep.subr.bf16.mxu0 0
        %393 = vmatpush1.bf16.msra.mxu0 %v365
        %394 = vmatprep.subr.bf16.mxu0 0
        %395 = vmatpush1.bf16.msra.mxu0 %v364
        %396 = vmatprep.subr.bf16.mxu0 0
        %397 = vmatpush2.bf16.msra.mxu0 0
        %398 = vmatprep.subr.bf16.mxu0 0
        %399 = vmatpush2.bf16.msra.mxu0 0
        %400 = vmatprep.subr.bf16.mxu0 0
        %401 = vmatpush2.bf16.msra.mxu0 0
        %402 = vmatprep.subr.bf16.mxu0 0
        %403 = vmatpush2.bf16.msra.mxu0 0
        %404 = vmatprep.subr.bf16.mxu0 0
        %405 = vmatpush2.bf16.msra.mxu0 0
        %406 = vmatprep.subr.bf16.mxu0 0
        %407 = vmatpush2.bf16.msra.mxu0 0
        %408 = vmatprep.subr.bf16.mxu0 0
        %409 = vmatpush2.bf16.msra.mxu0 0
        %410 = vmatprep.subr.bf16.mxu0 0
        %411 = vmatpush2.bf16.msra.mxu0 0
        %412 = vmatprep.mubr.bf16.mxu0 0
        %413 = vmatmul.mubr.bf16.gmra.mxu0 %v293
        %v414 = vpop.f32.mrf.mxu0
        %v415 = vadd.f32 %v330, %v414
        %v416 = vpop.f32.mrf.mxu0
        %v417 = vpop.f32.mrf.mxu0
        %v418 = vadd.f32 %v330, %v417
        %v419 = vpop.f32.mrf.mxu0
        %420 = vmatprep.mubr.bf16.mxu0 0
        %421 = vmatmul.mubr.bf16.gmra.mxu0 %v294
        %v422 = vpop.f32.mrf.mxu0
        %v423 = vadd.f32 %v330, %v422
        %v424 = vpop.f32.mrf.mxu0
        %v425 = vpop.f32.mrf.mxu0
        %v426 = vadd.f32 %v330, %v425
        %v427 = vpop.f32.mrf.mxu0
        %428 = vmatprep.mubr.bf16.mxu0 0
        %429 = vmatmul.mubr.bf16.gmra.mxu0 %v295
        %v430 = vpop.f32.mrf.mxu0
        %v431 = vadd.f32 %v330, %v430
        %v432 = vpop.f32.mrf.mxu0
        %v433 = vpop.f32.mrf.mxu0
        %v434 = vadd.f32 %v330, %v433
        %v435 = vpop.f32.mrf.mxu0
        %436 = vmatprep.mubr.bf16.mxu0 0
        %437 = vmatmul.mubr.bf16.gmra.mxu0 %v296
        %v438 = vpop.f32.mrf.mxu0
        %v439 = vadd.f32 %v330, %v438
        %v440 = vpop.f32.mrf.mxu0
        %v441 = vpop.f32.mrf.mxu0
        %v442 = vadd.f32 %v330, %v441
        %v443 = vpop.f32.mrf.mxu0
        %444 = vmatprep.mubr.bf16.mxu0 0
        %445 = vmatmul.mubr.bf16.gmra.mxu0 %v297
        %v446 = vpop.f32.mrf.mxu0
        %v447 = vadd.f32 %v330, %v446
        %v448 = vpop.f32.mrf.mxu0
        %v449 = vpop.f32.mrf.mxu0
        %v450 = vadd.f32 %v330, %v449
        %v451 = vpop.f32.mrf.mxu0
        %452 = vmatprep.mubr.bf16.mxu0 0
        %453 = vmatmul.mubr.bf16.gmra.mxu0 %v298
        %v454 = vpop.f32.mrf.mxu0
        %v455 = vadd.f32 %v330, %v454
        %v456 = vpop.f32.mrf.mxu0
        %v457 = vpop.f32.mrf.mxu0
        %v458 = vadd.f32 %v330, %v457
        %v459 = vpop.f32.mrf.mxu0
        %460 = vmatprep.mubr.bf16.mxu0 0
        %461 = vmatmul.mubr.bf16.gmra.mxu0 %v299
        %v462 = vpop.f32.mrf.mxu0
        %v463 = vadd.f32 %v330, %v462
        %v464 = vpop.f32.mrf.mxu0
        %v465 = vpop.f32.mrf.mxu0
        %v466 = vadd.f32 %v330, %v465
        %v467 = vpop.f32.mrf.mxu0
        %468 = vmatprep.mubr.bf16.mxu0 0
        %469 = vmatmul.mubr.bf16.gmra.mxu0 %v300
        %v470 = vpop.f32.mrf.mxu0
        %v471 = vadd.f32 %v330, %v470
        %v472 = vpop.f32.mrf.mxu0
        %v473 = vpop.f32.mrf.mxu0
        %v474 = vadd.f32 %v330, %v473
        %v475 = vpop.f32.mrf.mxu0
        %476 = vmatprep.mubr.bf16.mxu0 0
        %477 = vmatmul.mubr.bf16.gmra.mxu0 %v301
        %v478 = vpop.f32.mrf.mxu0
        %v479 = vadd.f32 %v330, %v478
        %v480 = vpop.f32.mrf.mxu0
        %v481 = vpop.f32.mrf.mxu0
        %v482 = vadd.f32 %v330, %v481
        %v483 = vpop.f32.mrf.mxu0
        %484 = vmatprep.mubr.bf16.mxu0 0
        %485 = vmatmul.mubr.bf16.gmra.mxu0 %v302
        %v486 = vpop.f32.mrf.mxu0
        %v487 = vadd.f32 %v330, %v486
        %v488 = vpop.f32.mrf.mxu0
        %v489 = vpop.f32.mrf.mxu0
        %v490 = vadd.f32 %v330, %v489
        %v491 = vpop.f32.mrf.mxu0
        %492 = vmatprep.mubr.bf16.mxu0 0
        %493 = vmatmul.mubr.bf16.gmra.mxu0 %v303
        %v494 = vpop.f32.mrf.mxu0
        %v495 = vadd.f32 %v330, %v494
        %v496 = vpop.f32.mrf.mxu0
        %v497 = vpop.f32.mrf.mxu0
        %v498 = vadd.f32 %v330, %v497
        %v499 = vpop.f32.mrf.mxu0
        %500 = vmatprep.mubr.bf16.mxu0 0
        %501 = vmatmul.mubr.bf16.gmra.mxu0 %v304
        %v502 = vpop.f32.mrf.mxu0
        %v503 = vadd.f32 %v330, %v502
        %v504 = vpop.f32.mrf.mxu0
        %v505 = vpop.f32.mrf.mxu0
        %v506 = vadd.f32 %v330, %v505
        %v507 = vpop.f32.mrf.mxu0
        %508 = vmatprep.mubr.bf16.mxu0 0
        %509 = vmatmul.mubr.bf16.gmra.mxu0 %v305
        %v510 = vpop.f32.mrf.mxu0
        %v511 = vadd.f32 %v330, %v510
        %v512 = vpop.f32.mrf.mxu0
        %v513 = vpop.f32.mrf.mxu0
        %v514 = vadd.f32 %v330, %v513
        %v515 = vpop.f32.mrf.mxu0
        %516 = vmatprep.mubr.bf16.mxu0 0
        %517 = vmatmul.mubr.bf16.gmra.mxu0 %v306
        %v518 = vpop.f32.mrf.mxu0
        %v519 = vadd.f32 %v330, %v518
        %v520 = vpop.f32.mrf.mxu0
        %v521 = vpop.f32.mrf.mxu0
        %v522 = vadd.f32 %v330, %v521
        %v523 = vpop.f32.mrf.mxu0
        %524 = vmatprep.mubr.bf16.mxu0 0
        %525 = vmatmul.mubr.bf16.gmra.mxu0 %v307
        %v526 = vpop.f32.mrf.mxu0
        %v527 = vadd.f32 %v330, %v526
        %v528 = vpop.f32.mrf.mxu0
        %v529 = vpop.f32.mrf.mxu0
        %v530 = vadd.f32 %v330, %v529
        %v531 = vpop.f32.mrf.mxu0
        %532 = vmatprep.mubr.bf16.mxu0 0
        %533 = vmatmul.mubr.bf16.gmra.mxu0 %v308
        %v534 = vpop.f32.mrf.mxu0
        %v535 = vadd.f32 %v330, %v534
        %v536 = vpop.f32.mrf.mxu0
        %v537 = vpop.f32.mrf.mxu0
        %v538 = vadd.f32 %v330, %v537
        %v539 = vpop.f32.mrf.mxu0
        %540 = vdwg.mxu0
        %v541 = vmul.f32 %v415, 0.5
        %v542 = vmul.f32 %v418, 0.5
        %v543 = vmul.f32 %v423, 0.5
        %v544 = vmul.f32 %v426, 0.5
        %v545 = vmul.f32 %v431, 0.5
        %v546 = vmul.f32 %v434, 0.5
        %v547 = vmul.f32 %v439, 0.5
        %v548 = vmul.f32 %v442, 0.5
        %v549 = vmul.f32 %v447, 0.5
        %v550 = vmul.f32 %v450, 0.5
        %v551 = vmul.f32 %v455, 0.5
        %v552 = vmul.f32 %v458, 0.5
        %v553 = vmul.f32 %v463, 0.5
        %v554 = vmul.f32 %v466, 0.5
        %v555 = vmul.f32 %v471, 0.5
        %v556 = vmul.f32 %v474, 0.5
        %v557 = vmul.f32 %v479, 0.5
        %v558 = vmul.f32 %v482, 0.5
        %v559 = vmul.f32 %v487, 0.5
        %v560 = vmul.f32 %v490, 0.5
        %v561 = vmul.f32 %v495, 0.5
        %v562 = vmul.f32 %v498, 0.5
        %v563 = vmul.f32 %v503, 0.5
        %v564 = vmul.f32 %v506, 0.5
        %v565 = vmul.f32 %v511, 0.5
        %v566 = vmul.f32 %v514, 0.5
        %v567 = vmul.f32 %v519, 0.5
        %v568 = vmul.f32 %v522, 0.5
        %v569 = vmul.f32 %v527, 0.5
        %v570 = vmul.f32 %v530, 0.5
        %v571 = vmul.f32 %v535, 0.5
        %v572 = vmul.f32 %v538, 0.5
        %v573 = vmul.f32 %v415, 0.70710677
        %v574 = vmul.f32 %v418, 0.70710677
        %v575 = vmul.f32 %v423, 0.70710677
        %v576 = vmul.f32 %v426, 0.70710677
        %v577 = vmul.f32 %v431, 0.70710677
        %v578 = vmul.f32 %v434, 0.70710677
        %v579 = vmul.f32 %v439, 0.70710677
        %v580 = vmul.f32 %v442, 0.70710677
        %v581 = vmul.f32 %v447, 0.70710677
        %v582 = vmul.f32 %v450, 0.70710677
        %v583 = vmul.f32 %v455, 0.70710677
        %v584 = vmul.f32 %v458, 0.70710677
        %v585 = vmul.f32 %v463, 0.70710677
        %v586 = vmul.f32 %v466, 0.70710677
        %v587 = vmul.f32 %v471, 0.70710677
        %v588 = vmul.f32 %v474, 0.70710677
        %v589 = vmul.f32 %v479, 0.70710677
        %v590 = vmul.f32 %v482, 0.70710677
        %v591 = vmul.f32 %v487, 0.70710677
        %v592 = vmul.f32 %v490, 0.70710677
        %v593 = vmul.f32 %v495, 0.70710677
        %v594 = vmul.f32 %v498, 0.70710677
        %v595 = vmul.f32 %v503, 0.70710677
        %v596 = vmul.f32 %v506, 0.70710677
        %v597 = vmul.f32 %v511, 0.70710677
        %v598 = vmul.f32 %v514, 0.70710677
        %v599 = vmul.f32 %v519, 0.70710677
        %v600 = vmul.f32 %v522, 0.70710677
        %v601 = vmul.f32 %v527, 0.70710677
        %v602 = vmul.f32 %v530, 0.70710677
        %v603 = vmul.f32 %v535, 0.70710677
        %v604 = vmul.f32 %v538, 0.70710677
        %v605 = verf.f32.pop %v573
        %v606 = verf.f32.pop %v574
        %v607 = verf.f32.pop %v575
        %v608 = verf.f32.pop %v576
        %v609 = verf.f32.pop %v577
        %v610 = verf.f32.pop %v578
        %v611 = verf.f32.pop %v579
        %v612 = verf.f32.pop %v580
        %v613 = verf.f32.pop %v581
        %v614 = verf.f32.pop %v582
        %v615 = verf.f32.pop %v583
        %v616 = verf.f32.pop %v584
        %v617 = verf.f32.pop %v585
        %v618 = verf.f32.pop %v586
        %v619 = verf.f32.pop %v587
        %v620 = verf.f32.pop %v588
        %v621 = verf.f32.pop %v589
        %v622 = verf.f32.pop %v590
        %v623 = verf.f32.pop %v591
        %v624 = verf.f32.pop %v592
        %v625 = verf.f32.pop %v593
        %v626 = verf.f32.pop %v594
        %v627 = verf.f32.pop %v595
        %v628 = verf.f32.pop %v596
        %v629 = verf.f32.pop %v597
        %v630 = verf.f32.pop %v598
        %v631 = verf.f32.pop %v599
        %v632 = verf.f32.pop %v600
        %v633 = verf.f32.pop %v601
        %v634 = verf.f32.pop %v602
        %v635 = verf.f32.pop %v603
        %v636 = verf.f32.pop %v604
        %v637 = vadd.f32 %v605, 1.0
        %v638 = vadd.f32 %v606, 1.0
        %v639 = vadd.f32 %v607, 1.0
        %v640 = vadd.f32 %v608, 1.0
        %v641 = vadd.f32 %v609, 1.0
        %v642 = vadd.f32 %v610, 1.0
        %v643 = vadd.f32 %v611, 1.0
        %v644 = vadd.f32 %v612, 1.0
        %v645 = vadd.f32 %v613, 1.0
        %v646 = vadd.f32 %v614, 1.0
        %v647 = vadd.f32 %v615, 1.0
        %v648 = vadd.f32 %v616, 1.0
        %v649 = vadd.f32 %v617, 1.0
        %v650 = vadd.f32 %v618, 1.0
        %v651 = vadd.f32 %v619, 1.0
        %v652 = vadd.f32 %v620, 1.0
        %v653 = vadd.f32 %v621, 1.0
        %v654 = vadd.f32 %v622, 1.0
        %v655 = vadd.f32 %v623, 1.0
        %v656 = vadd.f32 %v624, 1.0
        %v657 = vadd.f32 %v625, 1.0
        %v658 = vadd.f32 %v626, 1.0
        %v659 = vadd.f32 %v627, 1.0
        %v660 = vadd.f32 %v628, 1.0
        %v661 = vadd.f32 %v629, 1.0
        %v662 = vadd.f32 %v630, 1.0
        %v663 = vadd.f32 %v631, 1.0
        %v664 = vadd.f32 %v632, 1.0
        %v665 = vadd.f32 %v633, 1.0
        %v666 = vadd.f32 %v634, 1.0
        %v667 = vadd.f32 %v635, 1.0
        %v668 = vadd.f32 %v636, 1.0
        %v669 = vmul.f32 %v541, %v637
        %v670 = vmul.f32 %v542, %v638
        %v671 = vmul.f32 %v543, %v639
        %v672 = vmul.f32 %v544, %v640
        %v673 = vmul.f32 %v545, %v641
        %v674 = vmul.f32 %v546, %v642
        %v675 = vmul.f32 %v547, %v643
        %v676 = vmul.f32 %v548, %v644
        %v677 = vmul.f32 %v549, %v645
        %v678 = vmul.f32 %v550, %v646
        %v679 = vmul.f32 %v551, %v647
        %v680 = vmul.f32 %v552, %v648
        %v681 = vmul.f32 %v553, %v649
        %v682 = vmul.f32 %v554, %v650
        %v683 = vmul.f32 %v555, %v651
        %v684 = vmul.f32 %v556, %v652
        %v685 = vmul.f32 %v557, %v653
        %v686 = vmul.f32 %v558, %v654
        %v687 = vmul.f32 %v559, %v655
        %v688 = vmul.f32 %v560, %v656
        %v689 = vmul.f32 %v561, %v657
        %v690 = vmul.f32 %v562, %v658
        %v691 = vmul.f32 %v563, %v659
        %v692 = vmul.f32 %v564, %v660
        %v693 = vmul.f32 %v565, %v661
        %v694 = vmul.f32 %v566, %v662
        %v695 = vmul.f32 %v567, %v663
        %v696 = vmul.f32 %v568, %v664
        %v697 = vmul.f32 %v569, %v665
        %v698 = vmul.f32 %v570, %v666
        %v699 = vmul.f32 %v571, %v667
        %v700 = vmul.f32 %v572, %v668
        %701 = vadd.xlane.f32.xlu0 %v669
        %v702 = vpop.xlane.xlu0 %701
        %703 = vadd.xlane.f32.xlu0 %v670
        %v704 = vpop.xlane.xlu0 %703
        %705 = vadd.xlane.f32.xlu0 %v671
        %v706 = vpop.xlane.xlu0 %705
        %707 = vadd.xlane.f32.xlu0 %v672
        %v708 = vpop.xlane.xlu0 %707
        %709 = vadd.xlane.f32.xlu0 %v673
        %v710 = vpop.xlane.xlu0 %709
        %711 = vadd.xlane.f32.xlu0 %v674
        %v712 = vpop.xlane.xlu0 %711
        %713 = vadd.xlane.f32.xlu0 %v675
        %v714 = vpop.xlane.xlu0 %713
        %715 = vadd.xlane.f32.xlu0 %v676
        %v716 = vpop.xlane.xlu0 %715
        %717 = vadd.xlane.f32.xlu0 %v677
        %v718 = vpop.xlane.xlu0 %717
        %719 = vadd.xlane.f32.xlu0 %v678
        %v720 = vpop.xlane.xlu0 %719
        %721 = vadd.xlane.f32.xlu0 %v679
        %v722 = vpop.xlane.xlu0 %721
        %723 = vadd.xlane.f32.xlu0 %v680
        %v724 = vpop.xlane.xlu0 %723
        %725 = vadd.xlane.f32.xlu0 %v681
        %v726 = vpop.xlane.xlu0 %725
        %727 = vadd.xlane.f32.xlu0 %v682
        %v728 = vpop.xlane.xlu0 %727
        %729 = vadd.xlane.f32.xlu0 %v683
        %v730 = vpop.xlane.xlu0 %729
        %731 = vadd.xlane.f32.xlu0 %v684
        %v732 = vpop.xlane.xlu0 %731
        %733 = vadd.xlane.f32.xlu0 %v685
        %v734 = vpop.xlane.xlu0 %733
        %735 = vadd.xlane.f32.xlu0 %v686
        %v736 = vpop.xlane.xlu0 %735
        %737 = vadd.xlane.f32.xlu0 %v687
        %v738 = vpop.xlane.xlu0 %737
        %739 = vadd.xlane.f32.xlu0 %v688
        %v740 = vpop.xlane.xlu0 %739
        %741 = vadd.xlane.f32.xlu0 %v689
        %v742 = vpop.xlane.xlu0 %741
        %743 = vadd.xlane.f32.xlu0 %v690
        %v744 = vpop.xlane.xlu0 %743
        %745 = vadd.xlane.f32.xlu0 %v691
        %v746 = vpop.xlane.xlu0 %745
        %747 = vadd.xlane.f32.xlu0 %v692
        %v748 = vpop.xlane.xlu0 %747
        %749 = vadd.xlane.f32.xlu0 %v693
        %v750 = vpop.xlane.xlu0 %749
        %751 = vadd.xlane.f32.xlu0 %v694
        %v752 = vpop.xlane.xlu0 %751
        %753 = vadd.xlane.f32.xlu0 %v695
        %v754 = vpop.xlane.xlu0 %753
        %755 = vadd.xlane.f32.xlu0 %v696
        %v756 = vpop.xlane.xlu0 %755
        %757 = vadd.xlane.f32.xlu0 %v697
        %v758 = vpop.xlane.xlu0 %757
        %759 = vadd.xlane.f32.xlu0 %v698
        %v760 = vpop.xlane.xlu0 %759
        %761 = vadd.xlane.f32.xlu0 %v699
        %v762 = vpop.xlane.xlu0 %761
        %763 = vadd.xlane.f32.xlu0 %v700
        %v764 = vpop.xlane.xlu0 %763
        %v765 = vmul.f32 %v669, %v669
        %v766 = vmul.f32 %v670, %v670
        %v767 = vmul.f32 %v671, %v671
        %v768 = vmul.f32 %v672, %v672
        %v769 = vmul.f32 %v673, %v673
        %v770 = vmul.f32 %v674, %v674
        %v771 = vmul.f32 %v675, %v675
        %v772 = vmul.f32 %v676, %v676
        %v773 = vmul.f32 %v677, %v677
        %v774 = vmul.f32 %v678, %v678
        %v775 = vmul.f32 %v679, %v679
        %v776 = vmul.f32 %v680, %v680
        %v777 = vmul.f32 %v681, %v681
        %v778 = vmul.f32 %v682, %v682
        %v779 = vmul.f32 %v683, %v683
        %v780 = vmul.f32 %v684, %v684
        %v781 = vmul.f32 %v685, %v685
        %v782 = vmul.f32 %v686, %v686
        %v783 = vmul.f32 %v687, %v687
        %v784 = vmul.f32 %v688, %v688
        %v785 = vmul.f32 %v689, %v689
        %v786 = vmul.f32 %v690, %v690
        %v787 = vmul.f32 %v691, %v691
        %v788 = vmul.f32 %v692, %v692
        %v789 = vmul.f32 %v693, %v693
        %v790 = vmul.f32 %v694, %v694
        %v791 = vmul.f32 %v695, %v695
        %v792 = vmul.f32 %v696, %v696
        %v793 = vmul.f32 %v697, %v697
        %v794 = vmul.f32 %v698, %v698
        %v795 = vmul.f32 %v699, %v699
        %v796 = vmul.f32 %v700, %v700
        %797 = vadd.xlane.f32.xlu0 %v765
        %v798 = vpop.xlane.xlu0 %797
        %799 = vadd.xlane.f32.xlu0 %v766
        %v800 = vpop.xlane.xlu0 %799
        %801 = vadd.xlane.f32.xlu0 %v767
        %v802 = vpop.xlane.xlu0 %801
        %803 = vadd.xlane.f32.xlu0 %v768
        %v804 = vpop.xlane.xlu0 %803
        %805 = vadd.xlane.f32.xlu0 %v769
        %v806 = vpop.xlane.xlu0 %805
        %807 = vadd.xlane.f32.xlu0 %v770
        %v808 = vpop.xlane.xlu0 %807
        %809 = vadd.xlane.f32.xlu0 %v771
        %v810 = vpop.xlane.xlu0 %809
        %811 = vadd.xlane.f32.xlu0 %v772
        %v812 = vpop.xlane.xlu0 %811
        %813 = vadd.xlane.f32.xlu0 %v773
        %v814 = vpop.xlane.xlu0 %813
        %815 = vadd.xlane.f32.xlu0 %v774
        %v816 = vpop.xlane.xlu0 %815
        %817 = vadd.xlane.f32.xlu0 %v775
        %v818 = vpop.xlane.xlu0 %817
        %819 = vadd.xlane.f32.xlu0 %v776
        %v820 = vpop.xlane.xlu0 %819
        %821 = vadd.xlane.f32.xlu0 %v777
        %v822 = vpop.xlane.xlu0 %821
        %823 = vadd.xlane.f32.xlu0 %v778
        %v824 = vpop.xlane.xlu0 %823
        %825 = vadd.xlane.f32.xlu0 %v779
        %v826 = vpop.xlane.xlu0 %825
        %827 = vadd.xlane.f32.xlu0 %v780
        %v828 = vpop.xlane.xlu0 %827
        %829 = vadd.xlane.f32.xlu0 %v781
        %v830 = vpop.xlane.xlu0 %829
        %831 = vadd.xlane.f32.xlu0 %v782
        %v832 = vpop.xlane.xlu0 %831
        %833 = vadd.xlane.f32.xlu0 %v783
        %v834 = vpop.xlane.xlu0 %833
        %835 = vadd.xlane.f32.xlu0 %v784
        %v836 = vpop.xlane.xlu0 %835
        %837 = vadd.xlane.f32.xlu0 %v785
        %v838 = vpop.xlane.xlu0 %837
        %839 = vadd.xlane.f32.xlu0 %v786
        %v840 = vpop.xlane.xlu0 %839
        %841 = vadd.xlane.f32.xlu0 %v787
        %v842 = vpop.xlane.xlu0 %841
        %843 = vadd.xlane.f32.xlu0 %v788
        %v844 = vpop.xlane.xlu0 %843
        %845 = vadd.xlane.f32.xlu0 %v789
        %v846 = vpop.xlane.xlu0 %845
        %847 = vadd.xlane.f32.xlu0 %v790
        %v848 = vpop.xlane.xlu0 %847
        %849 = vadd.xlane.f32.xlu0 %v791
        %v850 = vpop.xlane.xlu0 %849
        %851 = vadd.xlane.f32.xlu0 %v792
        %v852 = vpop.xlane.xlu0 %851
        %853 = vadd.xlane.f32.xlu0 %v793
        %v854 = vpop.xlane.xlu0 %853
        %855 = vadd.xlane.f32.xlu0 %v794
        %v856 = vpop.xlane.xlu0 %855
        %857 = vadd.xlane.f32.xlu0 %v795
        %v858 = vpop.xlane.xlu0 %857
        %859 = vadd.xlane.f32.xlu0 %v796
        %v860 = vpop.xlane.xlu0 %859
        %v861 = vmul.f32 %v702, 0.0078125
        %v862 = vmul.f32 %v704, 0.0078125
        %v863 = vmul.f32 %v706, 0.0078125
        %v864 = vmul.f32 %v708, 0.0078125
        %v865 = vmul.f32 %v710, 0.0078125
        %v866 = vmul.f32 %v712, 0.0078125
        %v867 = vmul.f32 %v714, 0.0078125
        %v868 = vmul.f32 %v716, 0.0078125
        %v869 = vmul.f32 %v718, 0.0078125
        %v870 = vmul.f32 %v720, 0.0078125
        %v871 = vmul.f32 %v722, 0.0078125
        %v872 = vmul.f32 %v724, 0.0078125
        %v873 = vmul.f32 %v726, 0.0078125
        %v874 = vmul.f32 %v728, 0.0078125
        %v875 = vmul.f32 %v730, 0.0078125
        %v876 = vmul.f32 %v732, 0.0078125
        %v877 = vmul.f32 %v734, 0.0078125
        %v878 = vmul.f32 %v736, 0.0078125
        %v879 = vmul.f32 %v738, 0.0078125
        %v880 = vmul.f32 %v740, 0.0078125
        %v881 = vmul.f32 %v742, 0.0078125
        %v882 = vmul.f32 %v744, 0.0078125
        %v883 = vmul.f32 %v746, 0.0078125
        %v884 = vmul.f32 %v748, 0.0078125
        %v885 = vmul.f32 %v750, 0.0078125
        %v886 = vmul.f32 %v752, 0.0078125
        %v887 = vmul.f32 %v754, 0.0078125
        %v888 = vmul.f32 %v756, 0.0078125
        %v889 = vmul.f32 %v758, 0.0078125
        %v890 = vmul.f32 %v760, 0.0078125
        %v891 = vmul.f32 %v762, 0.0078125
        %v892 = vmul.f32 %v764, 0.0078125
        %v893 = vmul.f32 %v798, 0.0078125
        %v894 = vmul.f32 %v800, 0.0078125
        %v895 = vmul.f32 %v802, 0.0078125
        %v896 = vmul.f32 %v804, 0.0078125
        %v897 = vmul.f32 %v806, 0.0078125
        %v898 = vmul.f32 %v808, 0.0078125
        %v899 = vmul.f32 %v810, 0.0078125
        %v900 = vmul.f32 %v812, 0.0078125
        %v901 = vmul.f32 %v814, 0.0078125
        %v902 = vmul.f32 %v816, 0.0078125
        %v903 = vmul.f32 %v818, 0.0078125
        %v904 = vmul.f32 %v820, 0.0078125
        %v905 = vmul.f32 %v822, 0.0078125
        %v906 = vmul.f32 %v824, 0.0078125
        %v907 = vmul.f32 %v826, 0.0078125
        %v908 = vmul.f32 %v828, 0.0078125
        %v909 = vmul.f32 %v830, 0.0078125
        %v910 = vmul.f32 %v832, 0.0078125
        %v911 = vmul.f32 %v834, 0.0078125
        %v912 = vmul.f32 %v836, 0.0078125
        %v913 = vmul.f32 %v838, 0.0078125
        %v914 = vmul.f32 %v840, 0.0078125
        %v915 = vmul.f32 %v842, 0.0078125
        %v916 = vmul.f32 %v844, 0.0078125
        %v917 = vmul.f32 %v846, 0.0078125
        %v918 = vmul.f32 %v848, 0.0078125
        %v919 = vmul.f32 %v850, 0.0078125
        %v920 = vmul.f32 %v852, 0.0078125
        %v921 = vmul.f32 %v854, 0.0078125
        %v922 = vmul.f32 %v856, 0.0078125
        %v923 = vmul.f32 %v858, 0.0078125
        %v924 = vmul.f32 %v860, 0.0078125
        %v925 = vmul.f32 %v861, %v861
        %v926 = vmul.f32 %v862, %v862
        %v927 = vmul.f32 %v863, %v863
        %v928 = vmul.f32 %v864, %v864
        %v929 = vmul.f32 %v865, %v865
        %v930 = vmul.f32 %v866, %v866
        %v931 = vmul.f32 %v867, %v867
        %v932 = vmul.f32 %v868, %v868
        %v933 = vmul.f32 %v869, %v869
        %v934 = vmul.f32 %v870, %v870
        %v935 = vmul.f32 %v871, %v871
        %v936 = vmul.f32 %v872, %v872
        %v937 = vmul.f32 %v873, %v873
        %v938 = vmul.f32 %v874, %v874
        %v939 = vmul.f32 %v875, %v875
        %v940 = vmul.f32 %v876, %v876
        %v941 = vmul.f32 %v877, %v877
        %v942 = vmul.f32 %v878, %v878
        %v943 = vmul.f32 %v879, %v879
        %v944 = vmul.f32 %v880, %v880
        %v945 = vmul.f32 %v881, %v881
        %v946 = vmul.f32 %v882, %v882
        %v947 = vmul.f32 %v883, %v883
        %v948 = vmul.f32 %v884, %v884
        %v949 = vmul.f32 %v885, %v885
        %v950 = vmul.f32 %v886, %v886
        %v951 = vmul.f32 %v887, %v887
        %v952 = vmul.f32 %v888, %v888
        %v953 = vmul.f32 %v889, %v889
        %v954 = vmul.f32 %v890, %v890
        %v955 = vmul.f32 %v891, %v891
        %v956 = vmul.f32 %v892, %v892
        %v957 = vsub.f32 %v893, %v925
        %v958 = vsub.f32 %v894, %v926
        %v959 = vsub.f32 %v895, %v927
        %v960 = vsub.f32 %v896, %v928
        %v961 = vsub.f32 %v897, %v929
        %v962 = vsub.f32 %v898, %v930
        %v963 = vsub.f32 %v899, %v931
        %v964 = vsub.f32 %v900, %v932
        %v965 = vsub.f32 %v901, %v933
        %v966 = vsub.f32 %v902, %v934
        %v967 = vsub.f32 %v903, %v935
        %v968 = vsub.f32 %v904, %v936
        %v969 = vsub.f32 %v905, %v937
        %v970 = vsub.f32 %v906, %v938
        %v971 = vsub.f32 %v907, %v939
        %v972 = vsub.f32 %v908, %v940
        %v973 = vsub.f32 %v909, %v941
        %v974 = vsub.f32 %v910, %v942
        %v975 = vsub.f32 %v911, %v943
        %v976 = vsub.f32 %v912, %v944
        %v977 = vsub.f32 %v913, %v945
        %v978 = vsub.f32 %v914, %v946
        %v979 = vsub.f32 %v915, %v947
        %v980 = vsub.f32 %v916, %v948
        %v981 = vsub.f32 %v917, %v949
        %v982 = vsub.f32 %v918, %v950
        %v983 = vsub.f32 %v919, %v951
        %v984 = vsub.f32 %v920, %v952
        %v985 = vsub.f32 %v921, %v953
        %v986 = vsub.f32 %v922, %v954
        %v987 = vsub.f32 %v923, %v955
        %v988 = vsub.f32 %v924, %v956
        %v989 = vsub.f32 %v669, %v861
        %v990 = vsub.f32 %v670, %v862
        %v991 = vsub.f32 %v671, %v863
        %v992 = vsub.f32 %v672, %v864
        %v993 = vsub.f32 %v673, %v865
        %v994 = vsub.f32 %v674, %v866
        %v995 = vsub.f32 %v675, %v867
        %v996 = vsub.f32 %v676, %v868
        %v997 = vsub.f32 %v677, %v869
        %v998 = vsub.f32 %v678, %v870
        %v999 = vsub.f32 %v679, %v871
        %v1000 = vsub.f32 %v680, %v872
        %v1001 = vsub.f32 %v681, %v873
        %v1002 = vsub.f32 %v682, %v874
        %v1003 = vsub.f32 %v683, %v875
        %v1004 = vsub.f32 %v684, %v876
        %v1005 = vsub.f32 %v685, %v877
        %v1006 = vsub.f32 %v686, %v878
        %v1007 = vsub.f32 %v687, %v879
        %v1008 = vsub.f32 %v688, %v880
        %v1009 = vsub.f32 %v689, %v881
        %v1010 = vsub.f32 %v690, %v882
        %v1011 = vsub.f32 %v691, %v883
        %v1012 = vsub.f32 %v692, %v884
        %v1013 = vsub.f32 %v693, %v885
        %v1014 = vsub.f32 %v694, %v886
        %v1015 = vsub.f32 %v695, %v887
        %v1016 = vsub.f32 %v696, %v888
        %v1017 = vsub.f32 %v697, %v889
        %v1018 = vsub.f32 %v698, %v890
        %v1019 = vsub.f32 %v699, %v891
        %v1020 = vsub.f32 %v700, %v892
        %v1021 = vadd.f32 %v957, 1e-12
        %v1022 = vadd.f32 %v958, 1e-12
        %v1023 = vadd.f32 %v959, 1e-12
        %v1024 = vadd.f32 %v960, 1e-12
        %v1025 = vadd.f32 %v961, 1e-12
        %v1026 = vadd.f32 %v962, 1e-12
        %v1027 = vadd.f32 %v963, 1e-12
        %v1028 = vadd.f32 %v964, 1e-12
        %v1029 = vadd.f32 %v965, 1e-12
        %v1030 = vadd.f32 %v966, 1e-12
        %v1031 = vadd.f32 %v967, 1e-12
        %v1032 = vadd.f32 %v968, 1e-12
        %v1033 = vadd.f32 %v969, 1e-12
        %v1034 = vadd.f32 %v970, 1e-12
        %v1035 = vadd.f32 %v971, 1e-12
        %v1036 = vadd.f32 %v972, 1e-12
        %v1037 = vadd.f32 %v973, 1e-12
        %v1038 = vadd.f32 %v974, 1e-12
        %v1039 = vadd.f32 %v975, 1e-12
        %v1040 = vadd.f32 %v976, 1e-12
        %v1041 = vadd.f32 %v977, 1e-12
        %v1042 = vadd.f32 %v978, 1e-12
        %v1043 = vadd.f32 %v979, 1e-12
        %v1044 = vadd.f32 %v980, 1e-12
        %v1045 = vadd.f32 %v981, 1e-12
        %v1046 = vadd.f32 %v982, 1e-12
        %v1047 = vadd.f32 %v983, 1e-12
        %v1048 = vadd.f32 %v984, 1e-12
        %v1049 = vadd.f32 %v985, 1e-12
        %v1050 = vadd.f32 %v986, 1e-12
        %v1051 = vadd.f32 %v987, 1e-12
        %v1052 = vadd.f32 %v988, 1e-12
        %v1053 = vrsqrt.pop %v1021
        %v1054 = vrsqrt.pop %v1022
        %v1055 = vrsqrt.pop %v1023
        %v1056 = vrsqrt.pop %v1024
        %v1057 = vrsqrt.pop %v1025
        %v1058 = vrsqrt.pop %v1026
        %v1059 = vrsqrt.pop %v1027
        %v1060 = vrsqrt.pop %v1028
        %v1061 = vrsqrt.pop %v1029
        %v1062 = vrsqrt.pop %v1030
        %v1063 = vrsqrt.pop %v1031
        %v1064 = vrsqrt.pop %v1032
        %v1065 = vrsqrt.pop %v1033
        %v1066 = vrsqrt.pop %v1034
        %v1067 = vrsqrt.pop %v1035
        %v1068 = vrsqrt.pop %v1036
        %v1069 = vrsqrt.pop %v1037
        %v1070 = vrsqrt.pop %v1038
        %v1071 = vrsqrt.pop %v1039
        %v1072 = vrsqrt.pop %v1040
        %v1073 = vrsqrt.pop %v1041
        %v1074 = vrsqrt.pop %v1042
        %v1075 = vrsqrt.pop %v1043
        %v1076 = vrsqrt.pop %v1044
        %v1077 = vrsqrt.pop %v1045
        %v1078 = vrsqrt.pop %v1046
        %v1079 = vrsqrt.pop %v1047
        %v1080 = vrsqrt.pop %v1048
        %v1081 = vrsqrt.pop %v1049
        %v1082 = vrsqrt.pop %v1050
        %v1083 = vrsqrt.pop %v1051
        %v1084 = vrsqrt.pop %v1052
        %v1085 = vmul.f32 %v989, %v1053
        %v1086 = vmul.f32 %v990, %v1054
        %v1087 = vmul.f32 %v991, %v1055
        %v1088 = vmul.f32 %v992, %v1056
        %v1089 = vmul.f32 %v993, %v1057
        %v1090 = vmul.f32 %v994, %v1058
        %v1091 = vmul.f32 %v995, %v1059
        %v1092 = vmul.f32 %v996, %v1060
        %v1093 = vmul.f32 %v997, %v1061
        %v1094 = vmul.f32 %v998, %v1062
        %v1095 = vmul.f32 %v999, %v1063
        %v1096 = vmul.f32 %v1000, %v1064
        %v1097 = vmul.f32 %v1001, %v1065
        %v1098 = vmul.f32 %v1002, %v1066
        %v1099 = vmul.f32 %v1003, %v1067
        %v1100 = vmul.f32 %v1004, %v1068
        %v1101 = vmul.f32 %v1005, %v1069
        %v1102 = vmul.f32 %v1006, %v1070
        %v1103 = vmul.f32 %v1007, %v1071
        %v1104 = vmul.f32 %v1008, %v1072
        %v1105 = vmul.f32 %v1009, %v1073
        %v1106 = vmul.f32 %v1010, %v1074
        %v1107 = vmul.f32 %v1011, %v1075
        %v1108 = vmul.f32 %v1012, %v1076
        %v1109 = vmul.f32 %v1013, %v1077
        %v1110 = vmul.f32 %v1014, %v1078
        %v1111 = vmul.f32 %v1015, %v1079
        %v1112 = vmul.f32 %v1016, %v1080
        %v1113 = vmul.f32 %v1017, %v1081
        %v1114 = vmul.f32 %v1018, %v1082
        %v1115 = vmul.f32 %v1019, %v1083
        %v1116 = vmul.f32 %v1020, %v1084
        %v1117 = vld [vmem:[%s3] sm:$0x1]
        %v1119 = vlaneseq
        %v1120 = vshrl.u32 %v1119, 7
        %v1121 = vsub.s32 0, %v1120
        %v1122 = vrot.slane %v1117, %v1121
        %v1124 = vmul.f32 %v1085, %v1122
        %v1125 = vmul.f32 %v1086, %v1122
        %v1126 = vmul.f32 %v1087, %v1122
        %v1127 = vmul.f32 %v1088, %v1122
        %v1128 = vmul.f32 %v1089, %v1122
        %v1129 = vmul.f32 %v1090, %v1122
        %v1130 = vmul.f32 %v1091, %v1122
        %v1131 = vmul.f32 %v1092, %v1122
        %v1132 = vmul.f32 %v1093, %v1122
        %v1133 = vmul.f32 %v1094, %v1122
        %v1134 = vmul.f32 %v1095, %v1122
        %v1135 = vmul.f32 %v1096, %v1122
        %v1136 = vmul.f32 %v1097, %v1122
        %v1137 = vmul.f32 %v1098, %v1122
        %v1138 = vmul.f32 %v1099, %v1122
        %v1139 = vmul.f32 %v1100, %v1122
        %v1140 = vmul.f32 %v1101, %v1122
        %v1141 = vmul.f32 %v1102, %v1122
        %v1142 = vmul.f32 %v1103, %v1122
        %v1143 = vmul.f32 %v1104, %v1122
        %v1144 = vmul.f32 %v1105, %v1122
        %v1145 = vmul.f32 %v1106, %v1122
        %v1146 = vmul.f32 %v1107, %v1122
        %v1147 = vmul.f32 %v1108, %v1122
        %v1148 = vmul.f32 %v1109, %v1122
        %v1149 = vmul.f32 %v1110, %v1122
        %v1150 = vmul.f32 %v1111, %v1122
        %v1151 = vmul.f32 %v1112, %v1122
        %v1152 = vmul.f32 %v1113, %v1122
        %v1153 = vmul.f32 %v1114, %v1122
        %v1154 = vmul.f32 %v1115, %v1122
        %v1155 = vmul.f32 %v1116, %v1122
        %v1156 = vld [vmem:[%s4] sm:$0x1]
        %v1158 = vlaneseq
        %v1159 = vshrl.u32 %v1158, 7
        %v1160 = vsub.s32 0, %v1159
        %v1161 = vrot.slane %v1156, %v1160
        %v1163 = vadd.f32 %v1124, %v1161
        %v1164 = vadd.f32 %v1125, %v1161
        %v1165 = vadd.f32 %v1126, %v1161
        %v1166 = vadd.f32 %v1127, %v1161
        %v1167 = vadd.f32 %v1128, %v1161
        %v1168 = vadd.f32 %v1129, %v1161
        %v1169 = vadd.f32 %v1130, %v1161
        %v1170 = vadd.f32 %v1131, %v1161
        %v1171 = vadd.f32 %v1132, %v1161
        %v1172 = vadd.f32 %v1133, %v1161
        %v1173 = vadd.f32 %v1134, %v1161
        %v1174 = vadd.f32 %v1135, %v1161
        %v1175 = vadd.f32 %v1136, %v1161
        %v1176 = vadd.f32 %v1137, %v1161
        %v1177 = vadd.f32 %v1138, %v1161
        %v1178 = vadd.f32 %v1139, %v1161
        %v1179 = vadd.f32 %v1140, %v1161
        %v1180 = vadd.f32 %v1141, %v1161
        %v1181 = vadd.f32 %v1142, %v1161
        %v1182 = vadd.f32 %v1143, %v1161
        %v1183 = vadd.f32 %v1144, %v1161
        %v1184 = vadd.f32 %v1145, %v1161
        %v1185 = vadd.f32 %v1146, %v1161
        %v1186 = vadd.f32 %v1147, %v1161
        %v1187 = vadd.f32 %v1148, %v1161
        %v1188 = vadd.f32 %v1149, %v1161
        %v1189 = vadd.f32 %v1150, %v1161
        %v1190 = vadd.f32 %v1151, %v1161
        %v1191 = vadd.f32 %v1152, %v1161
        %v1192 = vadd.f32 %v1153, %v1161
        %v1193 = vadd.f32 %v1154, %v1161
        %v1194 = vadd.f32 %v1155, %v1161
        %1195 = vst [vmem:[%s257] sm:$0xff] %v1163
        %1196 = vst [vmem:[%s257 + $0x8] sm:$0xff] %v1164
        %1197 = vst [vmem:[%s257 + $0x10] sm:$0xff] %v1165
        %1198 = vst [vmem:[%s257 + $0x18] sm:$0xff] %v1166
        %1199 = vst [vmem:[%s257 + $0x20] sm:$0xff] %v1167
        %1200 = vst [vmem:[%s257 + $0x28] sm:$0xff] %v1168
        %1201 = vst [vmem:[%s257 + $0x30] sm:$0xff] %v1169
        %1202 = vst [vmem:[%s257 + $0x38] sm:$0xff] %v1170
        %1203 = vst [vmem:[%s257 + $0x40] sm:$0xff] %v1171
        %1204 = vst [vmem:[%s257 + $0x48] sm:$0xff] %v1172
        %1205 = vst [vmem:[%s257 + $0x50] sm:$0xff] %v1173
        %1206 = vst [vmem:[%s257 + $0x58] sm:$0xff] %v1174
        %1207 = vst [vmem:[%s257 + $0x60] sm:$0xff] %v1175
        %1208 = vst [vmem:[%s257 + $0x68] sm:$0xff] %v1176
        %1209 = vst [vmem:[%s257 + $0x70] sm:$0xff] %v1177
        %1210 = vst [vmem:[%s257 + $0x78] sm:$0xff] %v1178
        %1211 = vst [vmem:[%s257 + $0x80] sm:$0xff] %v1179
        %1212 = vst [vmem:[%s257 + $0x88] sm:$0xff] %v1180
        %1213 = vst [vmem:[%s257 + $0x90] sm:$0xff] %v1181
        %1214 = vst [vmem:[%s257 + $0x98] sm:$0xff] %v1182
        %1215 = vst [vmem:[%s257 + $0xa0] sm:$0xff] %v1183
        %1216 = vst [vmem:[%s257 + $0xa8] sm:$0xff] %v1184
        %1217 = vst [vmem:[%s257 + $0xb0] sm:$0xff] %v1185
        %1218 = vst [vmem:[%s257 + $0xb8] sm:$0xff] %v1186
        %1219 = vst [vmem:[%s257 + $0xc0] sm:$0xff] %v1187
        %1220 = vst [vmem:[%s257 + $0xc8] sm:$0xff] %v1188
        %1221 = vst [vmem:[%s257 + $0xd0] sm:$0xff] %v1189
        %1222 = vst [vmem:[%s257 + $0xd8] sm:$0xff] %v1190
        %1223 = vst [vmem:[%s257 + $0xe0] sm:$0xff] %v1191
        %1224 = vst [vmem:[%s257 + $0xe8] sm:$0xff] %v1192
        %1225 = vst [vmem:[%s257 + $0xf0] sm:$0xff] %v1193
        %1226 = vst [vmem:[%s257 + $0xf8] sm:$0xff] %v1194
        %s1227 = sand.u32 %s141, 1
        %s1228 = scalar_lea.sflag [#allocation4], %s1227
        %s1229 = sand.u32 %s141, 1
        %s1230 = smul.addr %s1229, 256
        %s1231 = scalar_lea.vmem [#allocation7], %s1230
        // Predicated region
        $region49: #{tpu_custom_call.1} parent=39 // pred_check
          %p1232 = pneg %p151
        $region50: #{tpu_custom_call.1} parent=39 // pred_check_branch
          %1234 = sbr.rel (%p1232) target = $region52
        $region51: #{tpu_custom_call.1} parent=39 // pred_region
          %s1235 = smul.u32 32, %s23
          %s1237 = ssub.s32 4096, 4096
          %1238 = vsyncadd %s1228, %s1237
          %s1239 = smul.addr %s1235, 128
          %s1240 = scalar_lea.hbm %s5, %s1239
          %s1241 = sshll.u32 %s1231, 4
          %s1242 = int_to_ptr.vmem [resolvable:$true] %s1241
          %1247 = dma.vmem_to_hbm [thread:$0]  %s1242, 4096, %s1240, %s1228, 128, 128, 8
        $region52: #{tpu_custom_call.1} parent=39 // pred_fallthru
          _
      $region40: #{tpu_custom_call.1} parent=5 // pred_fallthru
        _
      %p1248 = scmp.le.s32.totalorder 2, %s18
      // Predicated region
      $region53: #{tpu_custom_call.1} parent=5 // pred_check
        %p1249 = pneg %p1248
      $region54: #{tpu_custom_call.1} parent=5 // pred_check_branch
        %1251 = sbr.rel (%p1249) target = $region56
      $region55: #{tpu_custom_call.1} parent=5 // pred_region
        %s1252 = ssub.s32 %s18, 2
        // Predicated region
        $region57: #{tpu_custom_call.1} parent=55 // pred_check
          %p1253 = pneg %p157
        $region58: #{tpu_custom_call.1} parent=55 // pred_check_branch
          %1255 = sbr.rel (%p1253) target = $region60
        $region59: #{tpu_custom_call.1} parent=55 // pred_region
          %s1256 = sand.u32 %s142, 1
          %s1257 = scalar_lea.sflag [#allocation4], %s1256
          %s1258 = sand.u32 %s142, 1
          %s1259 = smul.addr %s1258, 256
          %s1260 = scalar_lea.vmem [#allocation7], %s1259
          %1261 = dma.done %s1257, 4096
        $region60: #{tpu_custom_call.1} parent=55 // pred_fallthru
          _
      $region56: #{tpu_custom_call.1} parent=5 // pred_fallthru
        _
    $region6: #{tpu_custom_call.1} parent=1 // loop_footer
      %s22 = sadd.s32 1, %s18
    $region7: #{tpu_custom_call.1} parent=1 // loop_footer_branch
      %17 = sbr.rel target = $region3
    $region8: #{tpu_custom_call.1} parent=1 // loop_exit
      _
    %1262 = vsyncpa [#allocation3], 1
    %s1263 = scalar_lea.sflag [#allocation3], 1
    %1264 = vsyncpa %s1263, 1
    %1265 = vsyncpa [#allocation6], 1
    %1266 = vsyncpa [#allocation4], 1
    %s1267 = scalar_lea.sflag [#allocation4], 1
    %1268 = vsyncpa %s1267, 1

</llo_original>
